<compile_context>
chip_gen: v7x
topology: tpu7x:2x2x1
jax: 0.10.0
libtpu: 0.0.40
codegen_flags: <defaults>
</compile_context>

<pallas_src>
import jax
import jax.numpy as jnp
from jax.experimental import pallas as pl
from jax.experimental.pallas import tpu as pltpu

_WIDTHS = (1024, 512, 256, 128)  # lane-dense slab widths (multiples of 128)
_TM_MAX = 512                    # max rows/block: 512*1024*4B = 2 MiB f32 per block
_MIN_STEPS = 4                   # aim for >=4 grid steps (pipelining + megacore)


def _preprocess_kernel(scale_ref, x_ref, o_ref):
    # The whole CnnEncoder.forward: float cast + scale by 1/range_size.
    o_ref[...] = x_ref[...].astype(jnp.float32) * scale_ref[0]


def _block_map(i, scale_ref):
    del scale_ref
    return (i, 0)


def _pick_slab(total: int):
    """Choose (width, rows, pad_elems) for a lane-dense 2D slab."""
    for w in _WIDTHS:
        if total % w == 0:
            return w, total // w, 0
    # Rare fallback: element count not a multiple of 128 -> pad flat input.
    w = _WIDTHS[0]
    padded = pl.cdiv(total, w) * w
    return w, padded // w, padded - total


def _pick_tm(rows: int) -> int:
    if rows <= _TM_MAX:
        return rows  # single block equal to the full row extent (always legal)
    # Multiple grid steps: rows/block is a multiple of 8 (sublane rule).
    return min(_TM_MAX, max(8, (pl.cdiv(rows, _MIN_STEPS) // 8) * 8))


@jax.jit
def cnn_encoder_forward(obs: jax.Array, range_size) -> jax.Array:
    """Pallas implementation of CnnEncoder.forward (== preprocess)."""
    # Matches torch: if 3D (C,H,W) -> unsqueeze batch dim.
    if obs.ndim == 3:
        obs = obs[None, ...]
    assert obs.ndim == 4, "expected NCHW (or CHW) observation"
    out_shape = obs.shape
    total = 1
    for d in out_shape:
        total *= d

    width, rows, pad = _pick_slab(total)
    tm = _pick_tm(rows)
    grid = (pl.cdiv(rows, tm),)  # boundary block (if any) is masked by Pallas

    flat = obs.reshape(-1)
    if pad:
        # TODO(synk): rare path (elements not a multiple of 128); costs one u8 copy.
        flat = jnp.pad(flat, (0, pad))
    x2d = flat.reshape(rows, width)

    # SMEM scalar via scalar prefetch -> no recompile when range_size changes.
    inv_range = (1.0 / jnp.asarray(range_size, jnp.float32)).reshape((1,))

    out2d = pl.pallas_call(
        _preprocess_kernel,
        out_shape=jax.ShapeDtypeStruct((rows, width), jnp.float32),
        grid_spec=pltpu.PrefetchScalarGridSpec(
            num_scalar_prefetch=1,
            grid=grid,
            in_specs=[pl.BlockSpec((tm, width), _block_map)],
            out_specs=pl.BlockSpec((tm, width), _block_map),
        ),
        compiler_params=pltpu.CompilerParams(
            dimension_semantics=("parallel",),   # shard rows across TCs (v7x megacore)
            vmem_limit_bytes=32 * 1024 * 1024,   # blocks use ~5 MiB double-buffered
        ),
    )(inv_range, x2d)

    if pad:
        return out2d.reshape(-1)[:total].reshape(out_shape)
    return out2d.reshape(out_shape)


if __name__ == "__main__":
    # Synthetic "obs_space": image-like Box(low=0, high=255) -> range_size = 255
    obs_low, obs_high = 0.0, 255.0
    range_size = obs_high - obs_low  # np.max(high) - np.min(low)

    key = jax.random.PRNGKey(0)
    k1, k2, k3, k4 = jax.random.split(key, 4)

    def make_obs(k, shape):
        return jax.random.randint(k, shape, 0, 256, dtype=jnp.int32).astype(jnp.uint8)

    # 1) Small NCHW batch (single-block grid).
    obs = make_obs(k1, (2, 4, 16, 16))
    out = jax.block_until_ready(cnn_encoder_forward(obs, range_size))
    ref = obs.astype(jnp.float32) / range_size
    assert out.shape == (2, 4, 16, 16) and out.dtype == jnp.float32
    assert bool(jnp.allclose(out, ref, atol=1e-6, rtol=1e-6))

    # 2) 3D (CHW) path -> unsqueezed to (1,C,H,W).
    out3d = jax.block_until_ready(cnn_encoder_forward(obs[0], range_size))
    assert out3d.shape == (1, 4, 16, 16)
    assert bool(jnp.allclose(out3d, ref[0:1], atol=1e-6, rtol=1e-6))

    # 3) Larger batch: multi-step grid, exact division (parallel axis across TCs).
    obs_big = make_obs(k2, (8, 8, 128, 128))
    out_big = jax.block_until_ready(cnn_encoder_forward(obs_big, range_size))
    ref_big = obs_big.astype(jnp.float32) / range_size
    assert out_big.shape == obs_big.shape and out_big.dtype == jnp.float32
    assert bool(jnp.allclose(out_big, ref_big, atol=1e-6, rtol=1e-6))

    # 4) Multi-step grid with a masked boundary block (rows % tm != 0).
    obs_edge = make_obs(k3, (6, 4, 160, 160))
    out_edge = jax.block_until_ready(cnn_encoder_forward(obs_edge, range_size))
    ref_edge = obs_edge.astype(jnp.float32) / range_size
    assert out_edge.shape == obs_edge.shape and out_edge.dtype == jnp.float32
    assert bool(jnp.allclose(out_edge, ref_edge, atol=1e-6, rtol=1e-6))

    # 5) Element count not a multiple of 128 -> pad fallback path.
    obs_odd = make_obs(k4, (2, 3, 5, 7))
    out_odd = jax.block_until_ready(cnn_encoder_forward(obs_odd, range_size))
    ref_odd = obs_odd.astype(jnp.float32) / range_size
    assert out_odd.shape == (2, 3, 5, 7) and out_odd.dtype == jnp.float32
    assert bool(jnp.allclose(out_odd, ref_odd, atol=1e-6, rtol=1e-6))

    print("KERNEL_OK")
</pallas_src>

<mosaic_0001>
module attributes {stable_mosaic.version = 11 : i64} {
  func.func @_preprocess_kernel(%arg0: i32, %arg1: memref<1xf32, #tpu.memory_space<smem>>, %arg2: memref<2x1024xi8, #tpu.memory_space<vmem>>, %arg3: memref<2x1024xf32, #tpu.memory_space<vmem>>) attributes {dimension_semantics = [#tpu.dimension_semantics<parallel>], iteration_bounds = array<i64: 1>, scalar_prefetch = 1 : i64, scratch_operands = 0 : i64, tpu.core_type = #tpu.core_type<tc>, window_params = [{transform_indices = @transform_0, window_bounds = array<i64: 2, 1024>}, {transform_indices = @transform_1, window_bounds = array<i64: 2, 1024>}]} {
    %c0 = arith.constant 0 : index
    %c0_0 = arith.constant 0 : index
    %0 = vector.load %arg2[%c0, %c0_0] : memref<2x1024xi8, #tpu.memory_space<vmem>>, vector<2x1024xi8>
    %1 = arith.uitofp %0 : vector<2x1024xi8> to vector<2x1024xf32>
    %c0_1 = arith.constant 0 : index
    %2 = memref.load %arg1[%c0_1] : memref<1xf32, #tpu.memory_space<smem>>
    %3 = vector.broadcast %2 : f32 to vector<2x1024xf32>
    %4 = arith.mulf %1, %3 : vector<2x1024xf32>
    %c0_2 = arith.constant 0 : index
    %c0_3 = arith.constant 0 : index
    %5 = vector.load %arg3[%c0_2, %c0_3] : memref<2x1024xf32, #tpu.memory_space<vmem>>, vector<2x1024xf32>
    tpu.vector_store %arg3[%c0_2, %c0_3], %4 {strides = array<i32>} : memref<2x1024xf32, #tpu.memory_space<vmem>>, vector<2x1024xf32>,
    return
  }
  func.func @transform_0(%arg0: i32, %arg1: memref<1xf32, #tpu.memory_space<smem>>) -> (i32, i32) {
    %c0_i32 = arith.constant 0 : i32
    %c0_i32_0 = arith.constant 0 : i32
    return %arg0, %c0_i32 : i32, i32
  }
  func.func @transform_1(%arg0: i32, %arg1: memref<1xf32, #tpu.memory_space<smem>>) -> (i32, i32) {
    %c0_i32 = arith.constant 0 : i32
    %c0_i32_0 = arith.constant 0 : i32
    return %arg0, %c0_i32 : i32, i32
  }
}

</mosaic_0001>

<llo_original>
// kernel: cnn_encoder_forward.1
$region0: #{cnn_encoder_forward.1}
  #allocation0 [shape = 'u32[]', space=smem, size = 0x4, offset = 0x4, fixed_abs, tag = 'smem constant byte address 0x4 - core index']
  #allocation1 [shape = 'u32[144,128]{1,0:T(1,128)}', space=vmem, size = 0x12000, scoped, tag = 'internal scratch']
  #allocation2 [shape = 's32[1]{0}', space=sflag, size = 0x4, scoped, tag = 'scoped memory for cnn_encoder_forward.1']
  #allocation3 [shape = 'f32[1]{0:T(128)S(6)}', space=smem, size = 0x200, scoped, tag = 'prefetched SMEM operand 0']
  %s0 = inlined_call_operand.<no memory space> [shape: f32[1], index: 0, kind: input, shape index: {}]
  %s1 = inlined_call_operand.vmem [shape: u8[2,1024], index: 1, kind: input, shape index: {}]
  %s2 = inlined_call_operand.vmem [shape: f32[2,1024], index: 2, kind: output, shape index: {}]
  %s3 = sld [smem:[#allocation0]]
  $region14: #{cnn_encoder_forward.1} parent=0
    _
  %s5 = ssub.s32 1, %s3
  %s6 = scalar_select 0, %s5, %s3
  %7 = sst [smem:[#allocation3]] %s0
  // Predicated region
  $region2: #{cnn_encoder_forward.1} parent=0 // pred_check
    _
  $region3: #{cnn_encoder_forward.1} parent=0 // pred_check_branch
    %9 = sbr.rel (0) target = $region5
  $region4: #{cnn_encoder_forward.1} parent=0 // pred_region
    _
  $region5: #{cnn_encoder_forward.1} parent=0 // pred_fallthru
    _
  %v10 = vld [vmem:[%s1] sm:$0xff]
  %v11 = vunpack.c.0.s8 %v10
  %v12 = vunpack.c.1.s8 %v10
  %v13 = vunpack.c.2.s8 %v10
  %v14 = vunpack.c.3.s8 %v10
  %v15 = vand.u32 %v11, 255
  %v16 = vand.u32 %v12, 255
  %v17 = vand.u32 %v13, 255
  %v18 = vand.u32 %v14, 255
  %v19 = vcvt.s32.f32 %v15
  %v20 = vcvt.s32.f32 %v16
  %v21 = vcvt.s32.f32 %v17
  %v22 = vcvt.s32.f32 %v18
  %s23 = sld [smem:[#allocation3]]
  %v24 = vstv %s23
  %v25 = vmul.f32 %v19, %v24
  %v26 = vmul.f32 %v20, %v24
  %v27 = vmul.f32 %v21, %v24
  %v28 = vmul.f32 %v22, %v24
  %v34 = vunpack.c.l.s4 1983009808
  %v35 = vunpack.c.0.s8 %v34
  %v36 = vlaneseq
  %v37 = vshrl.u32 %v36, 7
  %v38 = vsub.s32 %v35, %v37
  %v39 = vrot.slane %v25, %v38
  %v41 = vunpack.c.l.s4 1983009808
  %v42 = vunpack.c.0.s8 %v41
  %v43 = vlaneseq
  %v44 = vshrl.u32 %v43, 7
  %v45 = vsub.s32 %v42, %v44
  %v46 = vrot.slane %v26, %v45
  %v47 = vcombine.low %v39, %v46
  %v49 = vunpack.c.l.s4 1983009808
  %v50 = vunpack.c.0.s8 %v49
  %v51 = vlaneseq
  %v52 = vshrl.u32 %v51, 7
  %v53 = vsub.s32 %v50, %v52
  %v54 = vrot.slane %v27, %v53
  %v56 = vunpack.c.l.s4 1983009808
  %v57 = vunpack.c.0.s8 %v56
  %v58 = vlaneseq
  %v59 = vshrl.u32 %v58, 7
  %v60 = vsub.s32 %v57, %v59
  %v61 = vrot.slane %v28, %v60
  %v62 = vcombine.low %v54, %v61
  %65 = vst [vmem:[%s2] sm:$0xff] %v47
  %66 = vst [vmem:[%s2 + $0x8] sm:$0xff] %v62
  // Predicated region
  $region6: #{cnn_encoder_forward.1} parent=0 // pred_check
    _
  $region7: #{cnn_encoder_forward.1} parent=0 // pred_check_branch
    %68 = sbr.rel (0) target = $region9
  $region8: #{cnn_encoder_forward.1} parent=0 // pred_region
    _
  $region9: #{cnn_encoder_forward.1} parent=0 // pred_fallthru
    _
  // Predicated region
  $region10: #{cnn_encoder_forward.1} parent=0 // pred_check
    _
  $region11: #{cnn_encoder_forward.1} parent=0 // pred_check_branch
    %70 = sbr.rel (0) target = $region13
  $region12: #{cnn_encoder_forward.1} parent=0 // pred_region
    _
  $region13: #{cnn_encoder_forward.1} parent=0 // pred_fallthru
    _

</llo_original>
